<compile_context>
chip_gen: v6e
topology: v6e:2x2x1
jax: 0.10.0
libtpu: 0.0.40
codegen_flags: <defaults>
</compile_context>

<pallas_src>
import functools

import jax
import jax.numpy as jnp
from jax import lax
from jax.experimental import pallas as pl
from jax.experimental.pallas import tpu as pltpu

SUBLANE = 8  # f32 sublane tile


def _round_up(n, m):
    return ((n + m - 1) // m) * m


def _cdiv(a, b):
    return (a + b - 1) // b


def _sigmoidnet_kernel(x_ref, w1_ref, b1_ref, w2_ref, b2_ref, o_ref):
    # Layer 1: x @ w1 + b1, ReLU.  f32 MXU operands with f32 accumulation
    # (weights are resident; kernel is HBM-bound so f32 matmul is free).
    h = jnp.dot(x_ref[...], w1_ref[...], preferred_element_type=jnp.float32)
    h = jnp.maximum(h + b1_ref[...], 0.0)

    # Layer 2.
    out = jnp.dot(h, w2_ref[...], preferred_element_type=jnp.float32) + b2_ref[...]

    # sigmoid(out) = 1 / (1 + exp(-out)); exp goes to the EUP.  exp(-x) -> inf
    # for very negative logits gives 1/inf = 0 (saturated sigmoid), no NaN.
    sig = 1.0 / (1.0 + jnp.exp(-out))

    # Apply sigmoid to column 0 only, pass the rest through
    # (== torch.cat((sigmoid(o[:, :1]), o[:, 1:]), dim=1)).
    col = lax.broadcasted_iota(jnp.int32, out.shape, dimension=1)
    o_ref[...] = jnp.where(col == 0, sig, out).astype(o_ref.dtype)


def _pick_batch_tile(B, block_b):
    """Balanced, sublane-aligned batch tile.

    - Tiny batches: single step, block == full batch dim (tiling rule satisfied
      because the block equals the full array dim).
    - Mid/large batches: >= 2 grid steps so both v7x TensorCores get work, and
      tiles balanced via cdiv so a ragged last block replaces batch padding.
    """
    if B <= block_b:
        if B >= 256:
            tb = _round_up(_cdiv(B, 2), SUBLANE)
        else:
            tb = B
    else:
        n_steps = _cdiv(B, block_b)
        tb = _round_up(_cdiv(B, n_steps), SUBLANE)
    return min(tb, B)


@functools.partial(jax.jit, static_argnames=("block_b",))
def sigmoidnet_forward(x, w1, b1, w2, b2, *, block_b=4096):
    """x: [B, D_in] f32, w1: [D_in, D_hid], b1: [1, D_hid] (or [D_hid]),
    w2: [D_hid, D_out], b2: [1, D_out] (or [D_out])  ->  [B, D_out] f32."""
    B, d_in = x.shape
    d_hid = w1.shape[1]
    d_out = w2.shape[1]

    b1 = b1.reshape(1, d_hid).astype(jnp.float32)
    b2 = b2.reshape(1, d_out).astype(jnp.float32)
    w1 = w1.astype(jnp.float32)
    w2 = w2.astype(jnp.float32)

    tb = _pick_batch_tile(B, block_b)
    grid = _cdiv(B, tb)  # ragged last block; OOB rows are discarded on store

    return pl.pallas_call(
        _sigmoidnet_kernel,
        out_shape=jax.ShapeDtypeStruct((B, d_out), x.dtype),
        grid_spec=pltpu.PrefetchScalarGridSpec(
            num_scalar_prefetch=0,
            grid=(grid,),
            in_specs=[
                pl.BlockSpec((tb, d_in), lambda i: (i, 0)),      # streamed activations
                pl.BlockSpec((d_in, d_hid), lambda i: (0, 0)),   # resident weights
                pl.BlockSpec((1, d_hid), lambda i: (0, 0)),      # resident bias 1
                pl.BlockSpec((d_hid, d_out), lambda i: (0, 0)),  # resident weights
                pl.BlockSpec((1, d_out), lambda i: (0, 0)),      # resident bias 2
            ],
            out_specs=pl.BlockSpec((tb, d_out), lambda i: (i, 0)),
        ),
        compiler_params=pltpu.CompilerParams(
            # Batch tiles are independent -> shard across v7x's 2 TensorCores
            # (no-op on v5e/v6e).
            dimension_semantics=("parallel",),
        ),
    )(x, w1, b1, w2, b2)


def reference_forward(x, w1, b1, w2, b2):
    h = jnp.maximum(x @ w1 + b1.reshape(1, -1), 0.0)
    out = h @ w2 + b2.reshape(1, -1)
    return jnp.concatenate([jax.nn.sigmoid(out[:, :1]), out[:, 1:]], axis=1)


def _make_inputs(key, B, d_in, d_hid, d_out):
    kx, k1, k2, k3, k4 = jax.random.split(key, 5)
    x = jax.random.normal(kx, (B, d_in), dtype=jnp.float32)
    w1 = jax.random.normal(k1, (d_in, d_hid), dtype=jnp.float32) * (1.0 / jnp.sqrt(d_in))
    b1 = jax.random.normal(k2, (1, d_hid), dtype=jnp.float32) * 0.01
    w2 = jax.random.normal(k3, (d_hid, d_out), dtype=jnp.float32) * (1.0 / jnp.sqrt(d_hid))
    b2 = jax.random.normal(k4, (1, d_out), dtype=jnp.float32) * 0.01
    return x, w1, b1, w2, b2


if __name__ == "__main__":
    key = jax.random.PRNGKey(0)

    # Small deterministic shapes consistent with the FeedForward MLP.
    B, D_IN, D_HID, D_OUT = 8, 32, 64, 8
    x, w1, b1, w2, b2 = _make_inputs(key, B, D_IN, D_HID, D_OUT)

    out = sigmoidnet_forward(x, w1, b1, w2, b2)
    out = jax.block_until_ready(out)

    ref = reference_forward(x, w1, b1, w2, b2)
    assert out.shape == (B, D_OUT)
    assert jnp.allclose(out, ref, atol=1e-2, rtol=1e-2), "mismatch vs reference"

    # Exercise the multi-step grid + ragged last block path (B not a multiple
    # of the tile) to confirm it runs cleanly on hardware.
    B2 = 260
    x2, w1b, b1b, w2b, b2b = _make_inputs(jax.random.PRNGKey(1), B2, D_IN, D_HID, D_OUT)
    out2 = jax.block_until_ready(sigmoidnet_forward(x2, w1b, b1b, w2b, b2b))
    ref2 = reference_forward(x2, w1b, b1b, w2b, b2b)
    assert out2.shape == (B2, D_OUT)
    assert jnp.allclose(out2, ref2, atol=1e-2, rtol=1e-2), "ragged-grid mismatch"

    print("KERNEL_OK")
</pallas_src>

<mosaic_0001>
module attributes {stable_mosaic.version = 11 : i64} {
  func.func @_sigmoidnet_kernel(%arg0: i32, %arg1: memref<8x32xf32, #tpu.memory_space<vmem>>, %arg2: memref<32x64xf32, #tpu.memory_space<vmem>>, %arg3: memref<1x64xf32, #tpu.memory_space<vmem>>, %arg4: memref<64x8xf32, #tpu.memory_space<vmem>>, %arg5: memref<1x8xf32, #tpu.memory_space<vmem>>, %arg6: memref<8x8xf32, #tpu.memory_space<vmem>>) attributes {dimension_semantics = [#tpu.dimension_semantics<parallel>], iteration_bounds = array<i64: 1>, scalar_prefetch = 0 : i64, scratch_operands = 0 : i64, tpu.core_type = #tpu.core_type<tc>, window_params = [{transform_indices = @transform_0, window_bounds = array<i64: 8, 32>}, {pipeline_mode = #tpu.pipeline_mode<synchronous>, transform_indices = @transform_1, window_bounds = array<i64: 32, 64>}, {pipeline_mode = #tpu.pipeline_mode<synchronous>, transform_indices = @transform_2, window_bounds = array<i64: 1, 64>}, {pipeline_mode = #tpu.pipeline_mode<synchronous>, transform_indices = @transform_3, window_bounds = array<i64: 64, 8>}, {pipeline_mode = #tpu.pipeline_mode<synchronous>, transform_indices = @transform_4, window_bounds = array<i64: 1, 8>}, {transform_indices = @transform_5, window_bounds = array<i64: 8, 8>}]} {
    %c0 = arith.constant 0 : index
    %c0_0 = arith.constant 0 : index
    %0 = vector.load %arg1[%c0, %c0_0] : memref<8x32xf32, #tpu.memory_space<vmem>>, vector<8x32xf32>
    %c0_1 = arith.constant 0 : index
    %c0_2 = arith.constant 0 : index
    %1 = vector.load %arg2[%c0_1, %c0_2] : memref<32x64xf32, #tpu.memory_space<vmem>>, vector<32x64xf32>
    %cst = arith.constant dense<0.000000e+00> : vector<8x64xf32>
    %2 = tpu.matmul %0, %1, %cst {dimension_numbers = #tpu.dot_dimension_numbers<[1], [0], [0], [1], [0, 0, 1, 1], [], []>} : vector<8x32xf32>, vector<32x64xf32>, vector<8x64xf32> -> vector<8x64xf32>
    %c0_3 = arith.constant 0 : index
    %c0_4 = arith.constant 0 : index
    %3 = vector.load %arg3[%c0_3, %c0_4] : memref<1x64xf32, #tpu.memory_space<vmem>>, vector<1x64xf32>
    %4 = vector.broadcast %3 : vector<1x64xf32> to vector<8x64xf32>
    %5 = arith.addf %2, %4 : vector<8x64xf32>
    %cst_5 = arith.constant 0.000000e+00 : f32
    %6 = vector.broadcast %cst_5 : f32 to vector<8x64xf32>
    %7 = arith.maximumf %5, %6 : vector<8x64xf32>
    %c0_6 = arith.constant 0 : index
    %c0_7 = arith.constant 0 : index
    %8 = vector.load %arg4[%c0_6, %c0_7] : memref<64x8xf32, #tpu.memory_space<vmem>>, vector<64x8xf32>
    %cst_8 = arith.constant dense<0.000000e+00> : vector<8x8xf32>
    %9 = tpu.matmul %7, %8, %cst_8 {dimension_numbers = #tpu.dot_dimension_numbers<[1], [0], [0], [1], [0, 0, 1, 1], [], []>} : vector<8x64xf32>, vector<64x8xf32>, vector<8x8xf32> -> vector<8x8xf32>
    %c0_9 = arith.constant 0 : index
    %c0_10 = arith.constant 0 : index
    %10 = vector.load %arg5[%c0_9, %c0_10] : memref<1x8xf32, #tpu.memory_space<vmem>>, vector<1x8xf32>
    %11 = vector.broadcast %10 : vector<1x8xf32> to vector<8x8xf32>
    %12 = arith.addf %9, %11 : vector<8x8xf32>
    %cst_11 = arith.constant 0.000000e+00 : f32
    %13 = vector.broadcast %cst_11 : f32 to vector<8x8xf32>
    %14 = arith.subf %13, %12 : vector<8x8xf32>
    %15 = math.exp %14 : vector<8x8xf32>
    %cst_12 = arith.constant 1.000000e+00 : f32
    %16 = vector.broadcast %cst_12 : f32 to vector<8x8xf32>
    %17 = arith.addf %16, %15 : vector<8x8xf32>
    %cst_13 = arith.constant 1.000000e+00 : f32
    %18 = vector.broadcast %cst_13 : f32 to vector<8x8xf32>
    %19 = arith.divf %18, %17 : vector<8x8xf32>
    %20 = tpu.iota {dimensions = array<i32: 1>} : vector<8x8xi32>
    %c0_i32 = arith.constant 0 : i32
    %21 = vector.broadcast %c0_i32 : i32 to vector<8x8xi32>
    %22 = arith.cmpi eq, %20, %21 : vector<8x8xi32>
    %23 = arith.select %22, %19, %12 : vector<8x8xi1>, vector<8x8xf32>
    %c0_14 = arith.constant 0 : index
    %c0_15 = arith.constant 0 : index
    %24 = vector.load %arg6[%c0_14, %c0_15] : memref<8x8xf32, #tpu.memory_space<vmem>>, vector<8x8xf32>
    tpu.vector_store %arg6[%c0_14, %c0_15], %23 {strides = array<i32>} : memref<8x8xf32, #tpu.memory_space<vmem>>, vector<8x8xf32>,
    return
  }
  func.func @transform_0(%arg0: i32) -> (i32, i32) {
    %c0_i32 = arith.constant 0 : i32
    %c0_i32_0 = arith.constant 0 : i32
    return %arg0, %c0_i32 : i32, i32
  }
  func.func @transform_1(%arg0: i32) -> (i32, i32) {
    %c0_i32 = arith.constant 0 : i32
    %c0_i32_0 = arith.constant 0 : i32
    %c0_i32_1 = arith.constant 0 : i32
    return %c0_i32, %c0_i32_0 : i32, i32
  }
  func.func @transform_2(%arg0: i32) -> (i32, i32) {
    %c0_i32 = arith.constant 0 : i32
    %c0_i32_0 = arith.constant 0 : i32
    %c0_i32_1 = arith.constant 0 : i32
    return %c0_i32, %c0_i32_0 : i32, i32
  }
  func.func @transform_3(%arg0: i32) -> (i32, i32) {
    %c0_i32 = arith.constant 0 : i32
    %c0_i32_0 = arith.constant 0 : i32
    %c0_i32_1 = arith.constant 0 : i32
    return %c0_i32, %c0_i32_0 : i32, i32
  }
  func.func @transform_4(%arg0: i32) -> (i32, i32) {
    %c0_i32 = arith.constant 0 : i32
    %c0_i32_0 = arith.constant 0 : i32
    %c0_i32_1 = arith.constant 0 : i32
    return %c0_i32, %c0_i32_0 : i32, i32
  }
  func.func @transform_5(%arg0: i32) -> (i32, i32) {
    %c0_i32 = arith.constant 0 : i32
    %c0_i32_0 = arith.constant 0 : i32
    return %arg0, %c0_i32 : i32, i32
  }
}

</mosaic_0001>

<llo_original>
// kernel: sigmoidnet_forward.1
$region0: #{sigmoidnet_forward.1}
  #allocation0 [shape = 'u32[]', space=smem, size = 0x4, offset = 0x4, fixed_abs, tag = 'smem constant byte address 0x4 - core index']
  #allocation1 [shape = 'u32[144,128]{1,0:T(1,128)}', space=vmem, size = 0x12000, scoped, tag = 'internal scratch']
  %s0 = inlined_call_operand.vmem [shape: f32[8,32], index: 0, kind: input, shape index: {}]
  %s1 = inlined_call_operand.vmem [shape: f32[32,64], index: 1, kind: input, shape index: {}]
  %s2 = inlined_call_operand.vmem [shape: f32[1,64], index: 2, kind: input, shape index: {}]
  %s3 = inlined_call_operand.vmem [shape: f32[64,8], index: 3, kind: input, shape index: {}]
  %s4 = inlined_call_operand.vmem [shape: f32[1,8], index: 4, kind: input, shape index: {}]
  %s5 = inlined_call_operand.hbm [shape: f32[8,8], index: 5, kind: output, shape index: {}]
  %s6 = sld [smem:[#allocation0]]
  $region30: #{sigmoidnet_forward.1} parent=0
    _
  %s8 = ssub.s32 1, %s6
  %s9 = scalar_select 0, %s8, %s6
  $region1: #{sigmoidnet_forward.1} parent=0
    #allocation2 [shape = 'u8[4096]{0}', space=vmem, size = 0x1000, scoped, tag = 'output window, operand 0, single buffered']
    #allocation3 [shape = 's32[1]{0}', space=sflag, size = 0x4, scoped, tag = 'scoped memory for sigmoidnet_forward.1']
    %10 = vsyncpa [#allocation3], 0
    // Predicated region
    $region2: #{sigmoidnet_forward.1} parent=1 // pred_check
      _
    $region3: #{sigmoidnet_forward.1} parent=1 // pred_check_branch
      %12 = sbr.rel (0) target = $region5
    $region4: #{sigmoidnet_forward.1} parent=1 // pred_region
      _
    $region5: #{sigmoidnet_forward.1} parent=1 // pred_fallthru
      _
    // Predicated region
    $region6: #{sigmoidnet_forward.1} parent=1 // pred_check
      _
    $region7: #{sigmoidnet_forward.1} parent=1 // pred_check_branch
      %14 = sbr.rel (0) target = $region9
    $region8: #{sigmoidnet_forward.1} parent=1 // pred_region
      _
    $region9: #{sigmoidnet_forward.1} parent=1 // pred_fallthru
      _
    // Predicated region
    $region10: #{sigmoidnet_forward.1} parent=1 // pred_check
      _
    $region11: #{sigmoidnet_forward.1} parent=1 // pred_check_branch
      %16 = sbr.rel (0) target = $region13
    $region12: #{sigmoidnet_forward.1} parent=1 // pred_region
      _
    $region13: #{sigmoidnet_forward.1} parent=1 // pred_fallthru
      _
    // Predicated region
    $region14: #{sigmoidnet_forward.1} parent=1 // pred_check
      _
    $region15: #{sigmoidnet_forward.1} parent=1 // pred_check_branch
      %18 = sbr.rel (0) target = $region17
    $region16: #{sigmoidnet_forward.1} parent=1 // pred_region
      _
    $region17: #{sigmoidnet_forward.1} parent=1 // pred_fallthru
      _
    // Predicated region
    $region18: #{sigmoidnet_forward.1} parent=1 // pred_check
      _
    $region19: #{sigmoidnet_forward.1} parent=1 // pred_check_branch
      %20 = sbr.rel (0) target = $region21
    $region20: #{sigmoidnet_forward.1} parent=1 // pred_region
      _
    $region21: #{sigmoidnet_forward.1} parent=1 // pred_fallthru
      _
    %v21 = vld [vmem:[%s0] sm:$0xff]
    %v22 = vld [vmem:[%s1] sm:$0xff]
    %v23 = vld [vmem:[%s1 + $0x8] sm:$0xff]
    %v24 = vld [vmem:[%s1 + $0x10] sm:$0xff]
    %v25 = vld [vmem:[%s1 + $0x18] sm:$0xff]
    %v26 = vld [vmem:[%s2] sm:$0x1]
    %v28 = vlaneseq
    %v29 = vshrl.u32 %v28, 7
    %v30 = vsub.s32 0, %v29
    %v31 = vrot.slane %v26, %v30
    %vm33 = vcmask 261120
    %v35 = vsel %vm33, %v21, 0
    %37 = vmatprep.subr.mxu0 0.0
    %38 = vmatpush1.msra.mxu0 0.0
    %39 = vmatprep.subr.mxu0 0.0
    %40 = vmatpush1.msra.mxu0 0.0
    %41 = vmatprep.subr.mxu0 0.0
    %42 = vmatpush1.msra.mxu0 0.0
    %43 = vmatprep.subr.mxu0 0.0
    %44 = vmatpush1.msra.mxu0 0.0
    %45 = vmatprep.subr.mxu0 0.0
    %46 = vmatpush1.msra.mxu0 0.0
    %47 = vmatprep.subr.mxu0 0.0
    %48 = vmatpush1.msra.mxu0 0.0
    %49 = vmatprep.subr.mxu0 0.0
    %50 = vmatpush1.msra.mxu0 0.0
    %51 = vmatprep.subr.mxu0 0.0
    %52 = vmatpush1.msra.mxu0 0.0
    %53 = vmatprep.subr.mxu0 0.0
    %54 = vmatpush1.msra.mxu0 0.0
    %55 = vmatprep.subr.mxu0 0.0
    %56 = vmatpush1.msra.mxu0 0.0
    %57 = vmatprep.subr.mxu0 0.0
    %58 = vmatpush1.msra.mxu0 0.0
    %59 = vmatprep.subr.mxu0 0.0
    %60 = vmatpush1.msra.mxu0 0.0
    %61 = vmatprep.subr.mxu0 0.0
    %62 = vmatpush1.msra.mxu0 %v25
    %63 = vmatprep.subr.mxu0 0.0
    %64 = vmatpush1.msra.mxu0 %v24
    %65 = vmatprep.subr.mxu0 0.0
    %66 = vmatpush1.msra.mxu0 %v23
    %67 = vmatprep.subr.mxu0 0.0
    %68 = vmatpush1.msra.mxu0 %v22
    %69 = vmatprep.subr.mxu0 0.0
    %70 = vmatpush2.msra.mxu0 0.0
    %71 = vmatprep.subr.mxu0 0.0
    %72 = vmatpush2.msra.mxu0 0.0
    %73 = vmatprep.subr.mxu0 0.0
    %74 = vmatpush2.msra.mxu0 0.0
    %75 = vmatprep.subr.mxu0 0.0
    %76 = vmatpush2.msra.mxu0 0.0
    %77 = vmatprep.subr.mxu0 0.0
    %78 = vmatpush2.msra.mxu0 0.0
    %79 = vmatprep.subr.mxu0 0.0
    %80 = vmatpush2.msra.mxu0 0.0
    %81 = vmatprep.subr.mxu0 0.0
    %82 = vmatpush2.msra.mxu0 0.0
    %83 = vmatprep.subr.mxu0 0.0
    %84 = vmatpush2.msra.mxu0 0.0
    %85 = vmatprep.subr.mxu0 0.0
    %86 = vmatpush2.msra.mxu0 0.0
    %87 = vmatprep.subr.mxu0 0.0
    %88 = vmatpush2.msra.mxu0 0.0
    %89 = vmatprep.subr.mxu0 0.0
    %90 = vmatpush2.msra.mxu0 0.0
    %91 = vmatprep.subr.mxu0 0.0
    %92 = vmatpush2.msra.mxu0 0.0
    %93 = vmatprep.subr.mxu0 0.0
    %94 = vmatpush2.msra.mxu0 0.0
    %95 = vmatprep.subr.mxu0 0.0
    %96 = vmatpush2.msra.mxu0 0.0
    %97 = vmatprep.subr.mxu0 0.0
    %98 = vmatpush2.msra.mxu0 0.0
    %99 = vmatprep.subr.mxu0 0.0
    %100 = vmatpush2.msra.mxu0 0.0
    %101 = vmatprep.mubr.f32.mxu0 0.0
    %102 = vmatmul.mubr.f32.gmra.mxu0 %v35
    %v103 = vpop.f32.mrf.mxu0
    %v104 = vadd.f32 %v31, %v103
    %v105 = vpop.f32.mrf.mxu0
    %106 = vdwg.mxu0
    %v107 = vmax.f32 %v104, 0.0
    %v108 = vld [vmem:[%s3] sm:$0xff]
    %v109 = vld [vmem:[%s3 + $0x8] sm:$0xff]
    %v110 = vld [vmem:[%s3 + $0x10] sm:$0xff]
    %v111 = vld [vmem:[%s3 + $0x18] sm:$0xff]
    %v112 = vld [vmem:[%s3 + $0x20] sm:$0xff]
    %v113 = vld [vmem:[%s3 + $0x28] sm:$0xff]
    %v114 = vld [vmem:[%s3 + $0x30] sm:$0xff]
    %v115 = vld [vmem:[%s3 + $0x38] sm:$0xff]
    %v116 = vld [vmem:[%s4] sm:$0x1]
    %v118 = vlaneseq
    %v119 = vshrl.u32 %v118, 7
    %v120 = vsub.s32 0, %v119
    %v121 = vrot.slane %v116, %v120
    %vm123 = vcmask 523264
    %v125 = vsel %vm123, %v107, 0
    %127 = vmatprep.subr.mxu0 0.0
    %128 = vmatpush1.msra.mxu0 0.0
    %129 = vmatprep.subr.mxu0 0.0
    %130 = vmatpush1.msra.mxu0 0.0
    %131 = vmatprep.subr.mxu0 0.0
    %132 = vmatpush1.msra.mxu0 0.0
    %133 = vmatprep.subr.mxu0 0.0
    %134 = vmatpush1.msra.mxu0 0.0
    %135 = vmatprep.subr.mxu0 0.0
    %136 = vmatpush1.msra.mxu0 0.0
    %137 = vmatprep.subr.mxu0 0.0
    %138 = vmatpush1.msra.mxu0 0.0
    %139 = vmatprep.subr.mxu0 0.0
    %140 = vmatpush1.msra.mxu0 0.0
    %141 = vmatprep.subr.mxu0 0.0
    %142 = vmatpush1.msra.mxu0 0.0
    %143 = vmatprep.subr.mxu0 0.0
    %144 = vmatpush1.msra.mxu0 %v115
    %145 = vmatprep.subr.mxu0 0.0
    %146 = vmatpush1.msra.mxu0 %v114
    %147 = vmatprep.subr.mxu0 0.0
    %148 = vmatpush1.msra.mxu0 %v113
    %149 = vmatprep.subr.mxu0 0.0
    %150 = vmatpush1.msra.mxu0 %v112
    %151 = vmatprep.subr.mxu0 0.0
    %152 = vmatpush1.msra.mxu0 %v111
    %153 = vmatprep.subr.mxu0 0.0
    %154 = vmatpush1.msra.mxu0 %v110
    %155 = vmatprep.subr.mxu0 0.0
    %156 = vmatpush1.msra.mxu0 %v109
    %157 = vmatprep.subr.mxu0 0.0
    %158 = vmatpush1.msra.mxu0 %v108
    %159 = vmatprep.subr.mxu0 0.0
    %160 = vmatpush2.msra.mxu0 0.0
    %161 = vmatprep.subr.mxu0 0.0
    %162 = vmatpush2.msra.mxu0 0.0
    %163 = vmatprep.subr.mxu0 0.0
    %164 = vmatpush2.msra.mxu0 0.0
    %165 = vmatprep.subr.mxu0 0.0
    %166 = vmatpush2.msra.mxu0 0.0
    %167 = vmatprep.subr.mxu0 0.0
    %168 = vmatpush2.msra.mxu0 0.0
    %169 = vmatprep.subr.mxu0 0.0
    %170 = vmatpush2.msra.mxu0 0.0
    %171 = vmatprep.subr.mxu0 0.0
    %172 = vmatpush2.msra.mxu0 0.0
    %173 = vmatprep.subr.mxu0 0.0
    %174 = vmatpush2.msra.mxu0 0.0
    %175 = vmatprep.subr.mxu0 0.0
    %176 = vmatpush2.msra.mxu0 0.0
    %177 = vmatprep.subr.mxu0 0.0
    %178 = vmatpush2.msra.mxu0 0.0
    %179 = vmatprep.subr.mxu0 0.0
    %180 = vmatpush2.msra.mxu0 0.0
    %181 = vmatprep.subr.mxu0 0.0
    %182 = vmatpush2.msra.mxu0 0.0
    %183 = vmatprep.subr.mxu0 0.0
    %184 = vmatpush2.msra.mxu0 0.0
    %185 = vmatprep.subr.mxu0 0.0
    %186 = vmatpush2.msra.mxu0 0.0
    %187 = vmatprep.subr.mxu0 0.0
    %188 = vmatpush2.msra.mxu0 0.0
    %189 = vmatprep.subr.mxu0 0.0
    %190 = vmatpush2.msra.mxu0 0.0
    %191 = vmatprep.mubr.f32.mxu0 0.0
    %192 = vmatmul.mubr.f32.gmra.mxu0 %v125
    %v193 = vpop.f32.mrf.mxu0
    %v194 = vadd.f32 %v121, %v193
    %v195 = vpop.f32.mrf.mxu0
    %196 = vdwg.mxu0
    %v197 = vsub.f32 0.0, %v194
    %v198 = vmul.f32 %v197, 1.442695
    %v199 = vpow.pop %v198
    %v200 = vadd.f32 %v199, 1.0
    %v201 = vrcp.pop %v200
    %v202 = vmul.f32 1.0, %v201
    %v203 = vlaneseq
    %v204 = vand.u32 %v203, 127
    %vm205 = vcmp.eq.s32.totalorder %v204, 0
    %v206 = vsel %vm205, %v202, %v194
    %vm207 = vcmask 64512
    %208 = vst.msk [vmem:[#allocation2] sm:$0xff] %vm207, %v206
    // Predicated region
    $region22: #{sigmoidnet_forward.1} parent=1 // pred_check
      _
    $region23: #{sigmoidnet_forward.1} parent=1 // pred_check_branch
      %210 = sbr.rel (0) target = $region25
    $region24: #{sigmoidnet_forward.1} parent=1 // pred_region
      %s212 = ssub.s32 128, 128
      %213 = vsyncadd [#allocation3], %s212
      %s215 = sshll.u32 [#allocation2], 4
      %s216 = int_to_ptr.vmem [resolvable:$true] %s215
      %218 = dma.vmem_to_hbm [thread:$0]  %s216, 128, %s5, [#allocation3]
    $region25: #{sigmoidnet_forward.1} parent=1 // pred_fallthru
      _
    // Predicated region
    $region26: #{sigmoidnet_forward.1} parent=1 // pred_check
      _
    $region27: #{sigmoidnet_forward.1} parent=1 // pred_check_branch
      %220 = sbr.rel (0) target = $region29
    $region28: #{sigmoidnet_forward.1} parent=1 // pred_region
      %221 = dma.done [#allocation3], 128
    $region29: #{sigmoidnet_forward.1} parent=1 // pred_fallthru
      _
    %222 = vsyncpa [#allocation3], 1

</llo_original>
